<compile_context>
chip_gen: v7x
topology: tpu7x:2x2x1
jax: 0.10.0
libtpu: 0.0.40
codegen_flags: <defaults>
</compile_context>

<pallas_src>
import jax
import jax.numpy as jnp
from jax import lax
from jax.experimental import pallas as pl
from jax.experimental.pallas import tpu as pltpu


def _make_kernel(with_probs: bool):
    def kernel(logits_ref, *out_refs):
        if with_probs:
            logp_ref, probs_ref, ent_ref, best_ref = out_refs
        else:
            logp_ref, ent_ref, best_ref = out_refs

        x = logits_ref[...].astype(jnp.float32)              # (TB, A), f32 internal math
        tb, a = x.shape

        m = jnp.max(x, axis=-1, keepdims=True)                # (TB, 1)
        m_safe = jnp.where(m == -jnp.inf, 0.0, m)             # all-masked-row guard
        z = x - m_safe
        e = jnp.exp(z)                                         # EUP: the only full-tile transcendental
        s = jnp.sum(e, axis=-1, keepdims=True)                 # (TB, 1); >= 1 for unmasked rows
        s_safe = jnp.maximum(s, jnp.float32(1e-30))            # s == 0 only for fully-masked rows
        log_s = jnp.log(s_safe)                                # (TB, 1) EUP, cheap
        inv_s = pl.reciprocal(s_safe)                          # exact; per-row only (approx=True would
                                                               # also work but costs probs accuracy)
        logp = z - log_s                                       # log_softmax
        p = e * inv_s                                          # softmax reusing e (no 2nd full-tile exp)

        logp_ref[...] = logp.astype(logp_ref.dtype)
        if with_probs:
            probs_ref[...] = p.astype(probs_ref.dtype)

        # entropy, guarding 0 * (-inf) -> NaN when logits contain -inf (masked actions)
        plogp = jnp.where(p > 0.0, p * logp, 0.0)
        ent = -jnp.sum(plogp, axis=-1)                          # (TB,)
        ent_ref[...] = ent.reshape(1, 1, tb)                    # lane-dense store

        # argmax (first-max index): 2-D iota + masked min, lowering-safe
        idx = lax.broadcasted_iota(jnp.int32, x.shape, dimension=1)
        best = jnp.min(jnp.where(x == m, idx, jnp.int32(a)), axis=-1)   # (TB,) int32
        best = jnp.minimum(best, jnp.int32(a - 1))              # stay in-range under NaN logits
        best_ref[...] = best.reshape(1, 1, tb)

    return kernel


def _round_up(x, m):
    return ((x + m - 1) // m) * m


def _round_down(x, m):
    return (x // m) * m


def _vmem_budget_bytes():
    """(tile budget, vmem_limit_bytes) derived from the part's VMEM capacity."""
    try:
        cap = int(pltpu.get_tpu_info().vmem_capacity_bytes)
    except Exception:
        cap = 64 * 1024 * 1024          # v7x per-TC: most conservative current part
    budget = max(16 << 20, min(int(cap * 0.45), 56 << 20))
    limit = int(min(cap * 0.75, budget + (16 << 20)))
    return budget, limit


def categorical_policy_dist(logits, *, with_probs: bool = False, block_b=None):
    """logits (B, A) -> (log_probs (B,A), probs (B,A) or None, entropy (B,1) f32, best (B,1) i32).

    log_probs / probs are returned in the dtype of `logits` (bf16 in -> bf16 out).
    Fully-masked rows (all logits == -inf) yield logp=-inf, probs=0, entropy=0, best=0.
    """
    B, A = logits.shape
    in_dtype = logits.dtype
    itemsize = jnp.dtype(in_dtype).itemsize
    n_big = 1 + (2 if with_probs else 1)          # (B,A)-sized arrays: in + logp (+ probs)

    budget, vmem_limit = _vmem_budget_bytes()

    if block_b is None:
        # Lane-dense alignment for the entropy/best slabs: multiple of 128 when B permits.
        align = 128 if B >= 128 else 8
        # Per-row VMEM: double-buffered I/O tiles + f32 intermediates (x/e/logp/p)
        # + double-buffered ent/best lanes.
        per_row = 2 * n_big * A * itemsize + 4 * A * 4 + 2 * 8
        max_rows = max(align, _round_down(budget // per_row, align))
        # HBM-bound: target a MiB-scale (~2 MiB) input tile rather than a fixed row count.
        target_rows = max(align, _round_down((2 << 20) // (A * itemsize), align))
        block_b = min(target_rows, max_rows)
        # Keep >= 2 grid tiles when B permits: DMA/compute overlap everywhere, and the
        # "parallel" grid axis gives v7x's second TensorCore work.
        if B >= 2 * align:
            block_b = min(block_b, _round_up(-(-B // 2), align))
        block_b = max(align, block_b)

    if block_b >= B:
        block_b = B                               # block == full dim (any B allowed)
    else:
        base = 128 if (B >= 128 and block_b >= 128) else 8
        block_b = max(base, _round_down(block_b, base))

    num_tiles = pl.cdiv(B, block_b)

    ba_spec = pl.BlockSpec((block_b, A), lambda i: (i, 0))
    row_spec = pl.BlockSpec((1, 1, block_b), lambda i: (i, 0, 0))   # lane-dense per-row outs

    out_shapes = [jax.ShapeDtypeStruct((B, A), in_dtype)]           # log_probs
    out_specs = [ba_spec]
    if with_probs:
        out_shapes.append(jax.ShapeDtypeStruct((B, A), in_dtype))   # probs
        out_specs.append(ba_spec)
    out_shapes += [
        jax.ShapeDtypeStruct((num_tiles, 1, block_b), jnp.float32),  # entropy (lane-dense)
        jax.ShapeDtypeStruct((num_tiles, 1, block_b), jnp.int32),    # best_action (lane-dense)
    ]
    out_specs += [row_spec, row_spec]

    cost = pl.CostEstimate(
        flops=12 * B * A,
        transcendentals=B * A + 2 * B,            # one full-tile exp + per-row log & reciprocal
        bytes_accessed=n_big * B * A * itemsize + 8 * B,
    )

    outs = pl.pallas_call(
        _make_kernel(with_probs),
        out_shape=tuple(out_shapes),
        grid_spec=pltpu.PrefetchScalarGridSpec(
            num_scalar_prefetch=0,
            grid=(num_tiles,),
            in_specs=[ba_spec],
            out_specs=out_specs,
        ),
        compiler_params=pltpu.CompilerParams(
            dimension_semantics=("parallel",),    # rows independent; v7x shards across 2 TCs
            vmem_limit_bytes=vmem_limit,
        ),
        cost_estimate=cost,
    )(logits)

    if with_probs:
        logp, probs, ent_t, best_t = outs
    else:
        logp, ent_t, best_t = outs
        probs = None
    # Tiles are contiguous row blocks (only the last may be partial), so the first B
    # entries of the flattened slab are exactly rows 0..B-1.
    entropy = ent_t.reshape(-1)[:B].reshape(B, 1)
    best = best_t.reshape(-1)[:B].reshape(B, 1)
    return logp, probs, entropy, best


if __name__ == "__main__":
    key = jax.random.PRNGKey(0)

    # Small shapes consistent with a PolicyDist forward: batch=8, action_dim=16.
    B, A = 8, 16
    logits = jax.random.normal(key, (B, A), dtype=jnp.float32)

    ref_logp = jax.nn.log_softmax(logits, axis=-1)
    ref_probs = jax.nn.softmax(logits, axis=-1)
    ref_ent = -jnp.sum(ref_probs * ref_logp, axis=-1, keepdims=True)
    ref_best = jnp.argmax(logits, axis=-1).astype(jnp.int32)[:, None]

    # Full outputs (probs requested explicitly).
    logp, probs, entropy, best = jax.block_until_ready(
        categorical_policy_dist(logits, with_probs=True))
    assert jnp.allclose(logp, ref_logp, atol=1e-5)
    assert jnp.allclose(probs, ref_probs, atol=1e-5)
    assert jnp.allclose(entropy, ref_ent, atol=1e-5)
    assert jnp.array_equal(best, ref_best)

    # Default (bandwidth-friendly) path: no probs output; consumers use exp(logp).
    logp_np, probs_np, ent_np, best_np = jax.block_until_ready(
        categorical_policy_dist(logits))
    assert probs_np is None
    assert jnp.allclose(logp_np, ref_logp, atol=1e-5)
    assert jnp.allclose(ent_np, ref_ent, atol=1e-5)
    assert jnp.array_equal(best_np, ref_best)

    # Exercise batch tiling (grid > 1) and bf16 I/O at a still-small shape.
    B2, A2 = 24, 128
    logits2 = jax.random.normal(jax.random.PRNGKey(1), (B2, A2), dtype=jnp.bfloat16)
    logp2, probs2, ent2, best2 = jax.block_until_ready(
        categorical_policy_dist(logits2, with_probs=True, block_b=8))
    x2 = logits2.astype(jnp.float32)
    ref_logp2 = jax.nn.log_softmax(x2, axis=-1)
    ref_probs2 = jax.nn.softmax(x2, axis=-1)
    ref_ent2 = -jnp.sum(ref_probs2 * ref_logp2, axis=-1, keepdims=True)
    ref_best2 = jnp.argmax(x2, axis=-1).astype(jnp.int32)[:, None]
    assert jnp.allclose(logp2.astype(jnp.float32), ref_logp2, rtol=2e-2, atol=2e-2)
    assert jnp.allclose(probs2.astype(jnp.float32), ref_probs2, rtol=2e-2, atol=2e-2)
    assert jnp.allclose(ent2, ref_ent2, atol=1e-2)
    assert jnp.array_equal(best2, ref_best2)

    # Exercise the auto tile-sizing path (128-aligned lanes, >= 2 tiles for v7x).
    B3, A3 = 256, 18
    logits3 = jax.random.normal(jax.random.PRNGKey(2), (B3, A3), dtype=jnp.float32)
    logp3, probs3, ent3, best3 = jax.block_until_ready(
        categorical_policy_dist(logits3))
    ref_logp3 = jax.nn.log_softmax(logits3, axis=-1)
    ref_p3 = jax.nn.softmax(logits3, axis=-1)
    ref_ent3 = -jnp.sum(ref_p3 * ref_logp3, axis=-1, keepdims=True)
    ref_best3 = jnp.argmax(logits3, axis=-1).astype(jnp.int32)[:, None]
    assert probs3 is None
    assert jnp.allclose(logp3, ref_logp3, atol=1e-5)
    assert jnp.allclose(ent3, ref_ent3, atol=1e-5)
    assert jnp.array_equal(best3, ref_best3)

    # Masked-action logits (-inf): partially masked rows match a guarded reference.
    logits_m = logits.at[:, :4].set(-jnp.inf)
    logp_m, probs_m, ent_m, best_m = jax.block_until_ready(
        categorical_policy_dist(logits_m, with_probs=True))
    ref_logp_m = jax.nn.log_softmax(logits_m, axis=-1)
    ref_p_m = jax.nn.softmax(logits_m, axis=-1)
    ref_ent_m = -jnp.sum(jnp.where(ref_p_m > 0, ref_p_m * ref_logp_m, 0.0),
                         axis=-1, keepdims=True)
    ref_best_m = jnp.argmax(logits_m, axis=-1).astype(jnp.int32)[:, None]
    assert jnp.allclose(logp_m, ref_logp_m, atol=1e-5)
    assert jnp.allclose(probs_m, ref_p_m, atol=1e-5)
    assert jnp.allclose(ent_m, ref_ent_m, atol=1e-5)
    assert jnp.array_equal(best_m, ref_best_m)

    # Fully-masked rows follow the documented convention (no NaNs).
    full_mask = jnp.full((4, 16), -jnp.inf, dtype=jnp.float32)
    lp_f, pr_f, en_f, bs_f = jax.block_until_ready(
        categorical_policy_dist(full_mask, with_probs=True))
    assert bool(jnp.all(jnp.isneginf(lp_f)))
    assert bool(jnp.all(pr_f == 0.0))
    assert bool(jnp.all(en_f == 0.0))
    assert bool(jnp.all(bs_f == 0))

    print("KERNEL_OK")
</pallas_src>

<mosaic_0001>
module attributes {stable_mosaic.version = 11 : i64} {
  func.func @kernel(%arg0: i32, %arg1: memref<8x16xf32, #tpu.memory_space<vmem>>, %arg2: memref<8x16xf32, #tpu.memory_space<vmem>>, %arg3: memref<8x16xf32, #tpu.memory_space<vmem>>, %arg4: memref<1x1x8xf32, #tpu.memory_space<vmem>>, %arg5: memref<1x1x8xi32, #tpu.memory_space<vmem>>) attributes {dimension_semantics = [#tpu.dimension_semantics<parallel>], iteration_bounds = array<i64: 1>, scalar_prefetch = 0 : i64, scratch_operands = 0 : i64, tpu.core_type = #tpu.core_type<tc>, window_params = [{transform_indices = @transform_0, window_bounds = array<i64: 8, 16>}, {transform_indices = @transform_1, window_bounds = array<i64: 8, 16>}, {transform_indices = @transform_2, window_bounds = array<i64: 8, 16>}, {transform_indices = @transform_3, window_bounds = array<i64: 1, 1, 8>}, {transform_indices = @transform_4, window_bounds = array<i64: 1, 1, 8>}]} {
    %c0 = arith.constant 0 : index
    %c0_0 = arith.constant 0 : index
    %0 = vector.load %arg1[%c0, %c0_0] : memref<8x16xf32, #tpu.memory_space<vmem>>, vector<8x16xf32>
    %cst = arith.constant dense<0xFF800000> : vector<8xf32>
    %1 = vector.multi_reduction <maximumf>, %0, %cst [1] : vector<8x16xf32> to vector<8xf32>
    %2 = vector.shape_cast %1 : vector<8xf32> to vector<8x1xf32>
    %cst_1 = arith.constant 0xFF800000 : f32
    %3 = vector.broadcast %cst_1 : f32 to vector<8x1xf32>
    %4 = arith.cmpf oeq, %2, %3 : vector<8x1xf32>
    %cst_2 = arith.constant 0.000000e+00 : f32
    %5 = vector.broadcast %cst_2 : f32 to vector<8x1xf32>
    %6 = arith.select %4, %5, %2 : vector<8x1xi1>, vector<8x1xf32>
    %7 = vector.broadcast %6 : vector<8x1xf32> to vector<8x16xf32>
    %8 = arith.subf %0, %7 : vector<8x16xf32>
    %9 = math.exp %8 : vector<8x16xf32>
    %cst_3 = arith.constant dense<0.000000e+00> : vector<8xf32>
    %10 = vector.multi_reduction <add>, %9, %cst_3 [1] : vector<8x16xf32> to vector<8xf32>
    %11 = vector.shape_cast %10 : vector<8xf32> to vector<8x1xf32>
    %cst_4 = arith.constant 1.000000e-30 : f32
    %12 = vector.broadcast %cst_4 : f32 to vector<8x1xf32>
    %13 = arith.maximumf %11, %12 : vector<8x1xf32>
    %14 = math.log %13 : vector<8x1xf32>
    %15 = tpu.reciprocal %13 : vector<8x1xf32> -> vector<8x1xf32>
    %16 = vector.broadcast %14 : vector<8x1xf32> to vector<8x16xf32>
    %17 = arith.subf %8, %16 : vector<8x16xf32>
    %18 = vector.broadcast %15 : vector<8x1xf32> to vector<8x16xf32>
    %19 = arith.mulf %9, %18 : vector<8x16xf32>
    %c0_5 = arith.constant 0 : index
    %c0_6 = arith.constant 0 : index
    %20 = vector.load %arg2[%c0_5, %c0_6] : memref<8x16xf32, #tpu.memory_space<vmem>>, vector<8x16xf32>
    tpu.vector_store %arg2[%c0_5, %c0_6], %17 {strides = array<i32>} : memref<8x16xf32, #tpu.memory_space<vmem>>, vector<8x16xf32>,
    %c0_7 = arith.constant 0 : index
    %c0_8 = arith.constant 0 : index
    %21 = vector.load %arg3[%c0_7, %c0_8] : memref<8x16xf32, #tpu.memory_space<vmem>>, vector<8x16xf32>
    tpu.vector_store %arg3[%c0_7, %c0_8], %19 {strides = array<i32>} : memref<8x16xf32, #tpu.memory_space<vmem>>, vector<8x16xf32>,
    %cst_9 = arith.constant 0.000000e+00 : f32
    %22 = vector.broadcast %cst_9 : f32 to vector<8x16xf32>
    %23 = arith.cmpf ogt, %19, %22 : vector<8x16xf32>
    %24 = arith.mulf %19, %17 : vector<8x16xf32>
    %cst_10 = arith.constant 0.000000e+00 : f32
    %25 = vector.broadcast %cst_10 : f32 to vector<8x16xf32>
    %26 = arith.select %23, %24, %25 : vector<8x16xi1>, vector<8x16xf32>
    %cst_11 = arith.constant dense<0.000000e+00> : vector<8xf32>
    %27 = vector.multi_reduction <add>, %26, %cst_11 [1] : vector<8x16xf32> to vector<8xf32>
    %cst_12 = arith.constant 0.000000e+00 : f32
    %28 = vector.broadcast %cst_12 : f32 to vector<8xf32>
    %29 = arith.subf %28, %27 : vector<8xf32>
    %30 = vector.shape_cast %29 : vector<8xf32> to vector<1x1x8xf32>
    %c0_13 = arith.constant 0 : index
    %c0_14 = arith.constant 0 : index
    %c0_15 = arith.constant 0 : index
    %31 = vector.load %arg4[%c0_13, %c0_14, %c0_15] : memref<1x1x8xf32, #tpu.memory_space<vmem>>, vector<1x1x8xf32>
    tpu.vector_store %arg4[%c0_13, %c0_14, %c0_15], %30 {strides = array<i32>} : memref<1x1x8xf32, #tpu.memory_space<vmem>>, vector<1x1x8xf32>,
    %32 = tpu.iota {dimensions = array<i32: 1>} : vector<8x16xi32>
    %33 = vector.broadcast %2 : vector<8x1xf32> to vector<8x16xf32>
    %34 = arith.cmpf oeq, %0, %33 : vector<8x16xf32>
    %c16_i32 = arith.constant 16 : i32
    %35 = vector.broadcast %c16_i32 : i32 to vector<8x16xi32>
    %36 = arith.select %34, %32, %35 : vector<8x16xi1>, vector<8x16xi32>
    %cst_16 = arith.constant dense<2147483647> : vector<8xi32>
    %37 = vector.multi_reduction <minsi>, %36, %cst_16 [1] : vector<8x16xi32> to vector<8xi32>
    %c15_i32 = arith.constant 15 : i32
    %38 = vector.broadcast %c15_i32 : i32 to vector<8xi32>
    %39 = arith.minsi %37, %38 : vector<8xi32>
    %40 = vector.shape_cast %39 : vector<8xi32> to vector<1x1x8xi32>
    %c0_17 = arith.constant 0 : index
    %c0_18 = arith.constant 0 : index
    %c0_19 = arith.constant 0 : index
    %41 = vector.load %arg5[%c0_17, %c0_18, %c0_19] : memref<1x1x8xi32, #tpu.memory_space<vmem>>, vector<1x1x8xi32>
    tpu.vector_store %arg5[%c0_17, %c0_18, %c0_19], %40 {strides = array<i32>} : memref<1x1x8xi32, #tpu.memory_space<vmem>>, vector<1x1x8xi32>,
    return
  }
  func.func @transform_0(%arg0: i32) -> (i32, i32) {
    %c0_i32 = arith.constant 0 : i32
    %c0_i32_0 = arith.constant 0 : i32
    return %arg0, %c0_i32 : i32, i32
  }
  func.func @transform_1(%arg0: i32) -> (i32, i32) {
    %c0_i32 = arith.constant 0 : i32
    %c0_i32_0 = arith.constant 0 : i32
    return %arg0, %c0_i32 : i32, i32
  }
  func.func @transform_2(%arg0: i32) -> (i32, i32) {
    %c0_i32 = arith.constant 0 : i32
    %c0_i32_0 = arith.constant 0 : i32
    return %arg0, %c0_i32 : i32, i32
  }
  func.func @transform_3(%arg0: i32) -> (i32, i32, i32) {
    %c0_i32 = arith.constant 0 : i32
    %c0_i32_0 = arith.constant 0 : i32
    %c0_i32_1 = arith.constant 0 : i32
    return %arg0, %c0_i32, %c0_i32_0 : i32, i32, i32
  }
  func.func @transform_4(%arg0: i32) -> (i32, i32, i32) {
    %c0_i32 = arith.constant 0 : i32
    %c0_i32_0 = arith.constant 0 : i32
    %c0_i32_1 = arith.constant 0 : i32
    return %arg0, %c0_i32, %c0_i32_0 : i32, i32, i32
  }
}

</mosaic_0001>

<llo_original>
// kernel: tpu_custom_call.1
$region0: #{tpu_custom_call.1}
  #allocation0 [shape = 'u32[]', space=smem, size = 0x4, offset = 0x4, fixed_abs, tag = 'smem constant byte address 0x4 - core index']
  #allocation1 [shape = 'u32[144,128]{1,0:T(1,128)}', space=vmem, size = 0x12000, scoped, tag = 'internal scratch']
  %s0 = inlined_call_operand.hbm [shape: f32[8,16], index: 0, kind: input, shape index: {}]
  %s1 = inlined_call_operand.hbm [shape: f32[8,16], index: 1, kind: output, shape index: {0}]
  %s2 = inlined_call_operand.hbm [shape: f32[8,16], index: 2, kind: output, shape index: {1}]
  %s3 = inlined_call_operand.hbm [shape: f32[1,1,8], index: 3, kind: output, shape index: {2}]
  %s4 = inlined_call_operand.hbm [shape: s32[1,1,8], index: 4, kind: output, shape index: {3}]
  %5 = xla_tuple %s1, %s2, %s3, %s4
  %s6 = sld [smem:[#allocation0]]
  $region42: #{tpu_custom_call.1} parent=0
    _
  %s8 = ssub.s32 1, %s6
  %s9 = scalar_select 0, %s8, %s6
  $region1: #{tpu_custom_call.1} parent=0
    #allocation2 [shape = 'u8[4096]{0}', space=vmem, size = 0x1000, scoped, tag = 'input window, operand 0, single buffered']
    #allocation3 [shape = 's32[1]{0}', space=sflag, size = 0x4, scoped, tag = 'scoped memory for tpu_custom_call.1']
    #allocation4 [shape = 's32[1]{0}', space=sflag, size = 0x4, scoped, tag = 'scoped memory for tpu_custom_call.1']
    #allocation5 [shape = 'u8[4096]{0}', space=vmem, size = 0x1000, scoped, tag = 'output window, operand 0, single buffered']
    #allocation6 [shape = 'u8[4096]{0}', space=vmem, size = 0x1000, scoped, tag = 'output window, operand 1, single buffered']
    #allocation7 [shape = 's32[1]{0}', space=sflag, size = 0x4, scoped, tag = 'scoped memory for tpu_custom_call.1']
    #allocation8 [shape = 'u8[512]{0}', space=vmem, size = 0x400, scoped, tag = 'output window, operand 2, single buffered']
    #allocation9 [shape = 'u8[512]{0}', space=vmem, size = 0x400, scoped, tag = 'output window, operand 3, single buffered']
    #allocation10 [shape = 's32[1]{0}', space=sflag, size = 0x4, scoped, tag = 'scoped memory for tpu_custom_call.1']
    %10 = vsyncpa [#allocation3], 0
    %11 = vsyncpa [#allocation4], 0
    %12 = vsyncpa [#allocation7], 0
    %13 = vsyncpa [#allocation10], 0
    // Predicated region
    $region2: #{tpu_custom_call.1} parent=1 // pred_check
      _
    $region3: #{tpu_custom_call.1} parent=1 // pred_check_branch
      %15 = sbr.rel (0) target = $region5
    $region4: #{tpu_custom_call.1} parent=1 // pred_region
      %s17 = ssub.s32 128, 128
      %18 = vsyncadd [#allocation3], %s17
      %s20 = sshll.u32 [#allocation2], 4
      %s21 = int_to_ptr.vmem [resolvable:$true] %s20
      %23 = dma.hbm_to_vmem [thread:$0]  %s0, 128, %s21, [#allocation3]
    $region5: #{tpu_custom_call.1} parent=1 // pred_fallthru
      _
    // Predicated region
    $region6: #{tpu_custom_call.1} parent=1 // pred_check
      _
    $region7: #{tpu_custom_call.1} parent=1 // pred_check_branch
      %25 = sbr.rel (0) target = $region9
    $region8: #{tpu_custom_call.1} parent=1 // pred_region
      %26 = dma.done [#allocation3], 128
    $region9: #{tpu_custom_call.1} parent=1 // pred_fallthru
      _
    %v27 = vld [vmem:[#allocation2] sm:$0xff]
    %vm28 = vcmask 130048
    %v29 = vsel %vm28, %v27, -inf
    %30 = vmax.xlane.f32.xlu0 %v29
    %v31 = vpop.xlane.xlu0 %30
    %vm32 = vcmp.eq.f32.partialorder %v31, -inf
    %v33 = vsel %vm32, 0.0, %v31
    %v34 = vsub.f32 %v27, %v33
    %v35 = vmul.f32 %v34, 1.442695
    %v36 = vpow.pop %v35
    %v37 = vsel %vm28, %v36, 0.0
    %38 = vadd.xlane.f32.xlu0 %v37
    %v39 = vpop.xlane.xlu0 %38
    %v40 = vmax.f32 %v39, 1e-30
    %v41 = vlog2.pop %v40
    %v42 = vmul.f32 %v41, 0.6931472
    %v43 = vrcp.pop %v40
    %v44 = vsub.f32 %v34, %v42
    %v45 = vmul.f32 %v36, %v43
    %46 = vst.msk [vmem:[#allocation5] sm:$0xff] %vm28, %v44
    %47 = vst.msk [vmem:[#allocation6] sm:$0xff] %vm28, %v45
    %vm48 = vcmp.gt.f32.partialorder %v45, 0.0
    %v49 = vmul.f32 %v45, %v44
    %v50 = vsel %vm48, %v49, 0.0
    %v51 = vsel %vm28, %v50, 0.0
    %52 = vadd.xlane.f32.xlu0 %v51
    %v53 = vpop.xlane.xlu0 %52
    %v54 = vsub.f32 0.0, %v53
    %v56 = vlaneseq
    %v57 = vand.u32 %v56, 127
    %v58 = vlaneseq
    %v59 = vshrl.u32 %v58, 7
    %v60 = vsub.s32 %v57, %v59
    %v61 = vrot.slane %v54, %v60
    %vm63 = vcmask 57344
    %64 = vst.msk [vmem:[#allocation8] sm:$0x1] %vm63, %v61
    %vm65 = vcmp.eq.f32.partialorder %v27, %v31
    %v66 = vsel %vm65, %v57, 16
    %v67 = vsel %vm28, %v66, 2147483647
    %v68 = vand.u32 %v67, 65535
    %v69 = vshra.s32 %v67, 16
    %v70 = vcvt.s32.f32 %v68
    %v71 = vcvt.s32.f32 %v69
    %72 = vmin.xlane.f32.xlu0 %v71
    %v73 = vpop.xlane.xlu0 %72
    %vm74 = vcmp.eq.f32.partialorder %v71, %v73
    %v75 = vsel %vm74, %v70, inf
    %76 = vmin.xlane.f32.xlu0 %v75
    %v77 = vpop.xlane.xlu0 %76
    %v78 = vcvt.f32.s32 %v77
    %v79 = vcvt.f32.s32 %v73
    %v80 = vshll.u32 %v79, 16
    %v81 = vadd.s32 %v80, %v78
    %vm82 = vcmp.lt.s32.totalorder %v81, 15
    %v83 = vsel %vm82, %v81, 15
    %v84 = vlaneseq
    %v85 = vshrl.u32 %v84, 7
    %v86 = vsub.s32 %v57, %v85
    %v87 = vrot.slane %v83, %v86
    %88 = vst.msk [vmem:[#allocation9] sm:$0x1] %vm63, %v87
    // Predicated region
    $region10: #{tpu_custom_call.1} parent=1 // pred_check
      _
    $region11: #{tpu_custom_call.1} parent=1 // pred_check_branch
      %90 = sbr.rel (0) target = $region13
    $region12: #{tpu_custom_call.1} parent=1 // pred_region
      %s92 = ssub.s32 128, 128
      %93 = vsyncadd [#allocation4], %s92
      %s95 = sshll.u32 [#allocation5], 4
      %s96 = int_to_ptr.vmem [resolvable:$true] %s95
      %98 = dma.vmem_to_hbm [thread:$0]  %s96, 128, %s1, [#allocation4]
    $region13: #{tpu_custom_call.1} parent=1 // pred_fallthru
      _
    // Predicated region
    $region14: #{tpu_custom_call.1} parent=1 // pred_check
      _
    $region15: #{tpu_custom_call.1} parent=1 // pred_check_branch
      %100 = sbr.rel (0) target = $region17
    $region16: #{tpu_custom_call.1} parent=1 // pred_region
      %s102 = ssub.s32 128, 128
      %103 = vsyncadd [#allocation7], %s102
      %s105 = sshll.u32 [#allocation6], 4
      %s106 = int_to_ptr.vmem [resolvable:$true] %s105
      %108 = dma.vmem_to_hbm [thread:$0]  %s106, 128, %s2, [#allocation7]
    $region17: #{tpu_custom_call.1} parent=1 // pred_fallthru
      _
    // Predicated region
    $region18: #{tpu_custom_call.1} parent=1 // pred_check
      _
    $region19: #{tpu_custom_call.1} parent=1 // pred_check_branch
      %110 = sbr.rel (0) target = $region21
    $region20: #{tpu_custom_call.1} parent=1 // pred_region
      %s112 = ssub.s32 16, 16
      %113 = vsyncadd [#allocation7], %s112
      %s115 = sshll.u32 [#allocation8], 4
      %s116 = int_to_ptr.vmem [resolvable:$true] %s115
      %118 = dma.vmem_to_hbm [thread:$0]  %s116, 16, %s3, [#allocation7]
    $region21: #{tpu_custom_call.1} parent=1 // pred_fallthru
      _
    // Predicated region
    $region22: #{tpu_custom_call.1} parent=1 // pred_check
      _
    $region23: #{tpu_custom_call.1} parent=1 // pred_check_branch
      %120 = sbr.rel (0) target = $region25
    $region24: #{tpu_custom_call.1} parent=1 // pred_region
      %s122 = ssub.s32 16, 16
      %123 = vsyncadd [#allocation10], %s122
      %s125 = sshll.u32 [#allocation9], 4
      %s126 = int_to_ptr.vmem [resolvable:$true] %s125
      %128 = dma.vmem_to_hbm [thread:$0]  %s126, 16, %s4, [#allocation10]
    $region25: #{tpu_custom_call.1} parent=1 // pred_fallthru
      _
    // Predicated region
    $region26: #{tpu_custom_call.1} parent=1 // pred_check
      _
    $region27: #{tpu_custom_call.1} parent=1 // pred_check_branch
      %130 = sbr.rel (0) target = $region29
    $region28: #{tpu_custom_call.1} parent=1 // pred_region
      %131 = dma.done [#allocation4], 128
    $region29: #{tpu_custom_call.1} parent=1 // pred_fallthru
      _
    // Predicated region
    $region30: #{tpu_custom_call.1} parent=1 // pred_check
      _
    $region31: #{tpu_custom_call.1} parent=1 // pred_check_branch
      %133 = sbr.rel (0) target = $region33
    $region32: #{tpu_custom_call.1} parent=1 // pred_region
      %134 = dma.done [#allocation7], 128
    $region33: #{tpu_custom_call.1} parent=1 // pred_fallthru
      _
    // Predicated region
    $region34: #{tpu_custom_call.1} parent=1 // pred_check
      _
    $region35: #{tpu_custom_call.1} parent=1 // pred_check_branch
      %136 = sbr.rel (0) target = $region37
    $region36: #{tpu_custom_call.1} parent=1 // pred_region
      %137 = dma.done [#allocation7], 16
    $region37: #{tpu_custom_call.1} parent=1 // pred_fallthru
      _
    // Predicated region
    $region38: #{tpu_custom_call.1} parent=1 // pred_check
      _
    $region39: #{tpu_custom_call.1} parent=1 // pred_check_branch
      %139 = sbr.rel (0) target = $region41
    $region40: #{tpu_custom_call.1} parent=1 // pred_region
      %140 = dma.done [#allocation10], 16
    $region41: #{tpu_custom_call.1} parent=1 // pred_fallthru
      _
    %141 = vsyncpa [#allocation3], 1
    %142 = vsyncpa [#allocation4], 1
    %143 = vsyncpa [#allocation7], 1
    %144 = vsyncpa [#allocation10], 1

</llo_original>
